<compile_context>
chip_gen: v6e
topology: v6e:2x2x1
jax: 0.10.0
libtpu: 0.0.40
codegen_flags: <defaults>
</compile_context>

<pallas_src>
import jax
import jax.numpy as jnp
from jax.experimental import pallas as pl
from jax.experimental.pallas import tpu as pltpu


def _segse_kernel(cols_ref, w_ref, b_ref, o_ref):
    # cols_ref: (Kp, tile_l)      operand-dtype VMEM (im2col columns, K-padded)
    # w_ref   : (cout_p, Kp)      operand-dtype VMEM (fused w2 @ w1, zero-padded)
    # b_ref   : (cout_p, 1)       f32 VMEM           (fused w2 @ b1 + b2)
    # o_ref   : (cout_p, tile_l)  VMEM output tile (lane-dense, unmasked store)
    acc = jnp.dot(w_ref[...], cols_ref[...],
                  preferred_element_type=jnp.float32)        # single MXU matmul
    o_ref[...] = jax.nn.sigmoid(acc + b_ref[...]).astype(o_ref.dtype)


def seg_se_block(x, w1, b1, w2, b2, *, rate=2, operand_dtype=jnp.float32):
    """x: (N, Cin, D, H, W); w1: (Cmid, Cin, 3,3,3); b1: (Cmid,);
    w2: (Cout, Cmid); b2: (Cout,). Returns sigmoid(conv1(dila_conv(x)))."""
    n, cin, d, h, w = x.shape
    cmid = w1.shape[0]
    cout = w2.shape[0]
    dhw = d * h * w
    k = 27  # 3*3*3 taps

    # ---- Fuse the two linear maps (exact: no activation between the convs). ----
    w1f = w1.reshape(cmid, cin * k)                  # (Cmid, Cin*27)
    w_fused = w2 @ w1f                               # (Cout, Cin*27)
    b_fused = w2 @ b1 + b2                           # (Cout,)

    # ---- im2col for the dilated conv (padding=rate, dilation=rate). ----
    # Tap order (cin outer; kd, kh, kw inner) matches w1.reshape(cmid, cin*27).
    pad = rate
    xp = jnp.pad(x, ((0, 0), (0, 0), (pad, pad), (pad, pad), (pad, pad)))
    taps = [xp[:, :,
               kd * rate:kd * rate + d,
               kh * rate:kh * rate + h,
               kw * rate:kw * rate + w]
            for kd in range(3) for kh in range(3) for kw in range(3)]
    cols = jnp.stack(taps, axis=2).reshape(n, cin * k, dhw)       # (N, Cin*27, DHW)
    cols = cols.transpose(1, 0, 2).reshape(cin * k, n * dhw)      # (Cin*27, N*DHW)

    # ---- Padding / tiling. ----
    kdim = cin * k
    kp = 128 * pl.cdiv(kdim, 128)          # contraction dim -> multiple of 128
    cout_p = 8 * pl.cdiv(cout, 8)          # output sublanes -> multiple of 8
    l = n * dhw
    # At least 2 lane tiles (v7x megacore), each a multiple of 128, VMEM-capped.
    max_tile = 4096
    tile_l = max(128, min(max_tile, 128 * pl.cdiv(pl.cdiv(l, 2), 128)))
    num_tiles = pl.cdiv(l, tile_l)
    lp = num_tiles * tile_l

    cols_p = jnp.zeros((kp, lp), operand_dtype).at[:kdim, :l].set(
        cols.astype(operand_dtype))
    w_p = jnp.zeros((cout_p, kp), operand_dtype).at[:cout, :kdim].set(
        w_fused.astype(operand_dtype))
    b_p = jnp.zeros((cout_p, 1), jnp.float32).at[:cout, 0].set(
        b_fused.astype(jnp.float32))

    # VMEM budget: double-buffered cols/out tiles + resident weights + headroom.
    op_bytes = jnp.dtype(operand_dtype).itemsize
    out_bytes = jnp.dtype(x.dtype).itemsize
    vmem_bytes = int(2 * (kp * tile_l * op_bytes + cout_p * tile_l * out_bytes)
                     + cout_p * kp * op_bytes + cout_p * 4 + (4 << 20))

    out_flat = pl.pallas_call(
        _segse_kernel,
        out_shape=jax.ShapeDtypeStruct((cout_p, lp), x.dtype),
        grid=(num_tiles,),
        in_specs=[
            pl.BlockSpec((kp, tile_l), lambda i: (0, i)),     # im2col lane tile
            pl.BlockSpec((cout_p, kp), lambda i: (0, 0)),     # fused weights
            pl.BlockSpec((cout_p, 1), lambda i: (0, 0)),      # fused bias
        ],
        out_specs=pl.BlockSpec((cout_p, tile_l), lambda i: (0, i)),
        compiler_params=pltpu.CompilerParams(
            dimension_semantics=("parallel",),     # lane tiles are independent
            vmem_limit_bytes=vmem_bytes),
    )(cols_p, w_p, b_p)

    out = out_flat[:cout, :l].reshape(cout, n, dhw).transpose(1, 0, 2)
    return out.reshape(n, cout, d, h, w)


def _ref_forward(x, w1, b1, w2, b2, *, rate=2):
    """Pure-JAX reference matching torch.nn.Conv3d semantics (cross-correlation)."""
    dn1 = jax.lax.conv_dimension_numbers(x.shape, w1.shape,
                                         ('NCDHW', 'OIDHW', 'NCDHW'))
    y = jax.lax.conv_general_dilated(
        x, w1, window_strides=(1, 1, 1), padding=[(rate, rate)] * 3,
        rhs_dilation=(rate, rate, rate), dimension_numbers=dn1)
    y = y + b1.reshape(1, -1, 1, 1, 1)

    w2c = w2.reshape(w2.shape[0], w2.shape[1], 1, 1, 1)
    dn2 = jax.lax.conv_dimension_numbers(y.shape, w2c.shape,
                                         ('NCDHW', 'OIDHW', 'NCDHW'))
    z = jax.lax.conv_general_dilated(
        y, w2c, window_strides=(1, 1, 1), padding=[(0, 0)] * 3,
        dimension_numbers=dn2)
    z = z + b2.reshape(1, -1, 1, 1, 1)
    return jax.nn.sigmoid(z)


if __name__ == "__main__":
    # SegSEBlock(in_channels=4, rate=2) on a small NCDHW input.
    N, Cin, D, H, W = 2, 4, 8, 8, 8
    rate = 2
    Cmid, Cout = Cin // rate, Cin

    key = jax.random.PRNGKey(0)
    k1, k2, k3, k4, k5 = jax.random.split(key, 5)
    x = jax.random.normal(k1, (N, Cin, D, H, W), jnp.float32)
    # Deterministic synthetic parameters (shapes from the module's __init__).
    w1 = 0.1 * jax.random.normal(k2, (Cmid, Cin, 3, 3, 3), jnp.float32)
    b1 = 0.1 * jax.random.normal(k3, (Cmid,), jnp.float32)
    w2 = 0.1 * jax.random.normal(k4, (Cout, Cmid), jnp.float32)
    b2 = 0.1 * jax.random.normal(k5, (Cout,), jnp.float32)

    out = seg_se_block(x, w1, b1, w2, b2, rate=rate)
    out = jax.block_until_ready(out)

    ref = _ref_forward(x, w1, b1, w2, b2, rate=rate)
    assert out.shape == ref.shape, (out.shape, ref.shape)
    max_err = float(jnp.max(jnp.abs(out - ref)))
    assert max_err < 1e-4, f"max abs error {max_err}"

    print("KERNEL_OK")
</pallas_src>

<mosaic_0001>
module attributes {stable_mosaic.version = 11 : i64} {
  func.func @_segse_kernel(%arg0: i32, %arg1: memref<128x512xf32, #tpu.memory_space<vmem>>, %arg2: memref<8x128xf32, #tpu.memory_space<vmem>>, %arg3: memref<8x1xf32, #tpu.memory_space<vmem>>, %arg4: memref<8x512xf32, #tpu.memory_space<vmem>>) attributes {dimension_semantics = [#tpu.dimension_semantics<parallel>], iteration_bounds = array<i64: 2>, scalar_prefetch = 0 : i64, scratch_operands = 0 : i64, tpu.core_type = #tpu.core_type<tc>, window_params = [{transform_indices = @transform_0, window_bounds = array<i64: 128, 512>}, {pipeline_mode = #tpu.pipeline_mode<synchronous>, transform_indices = @transform_1, window_bounds = array<i64: 8, 128>}, {pipeline_mode = #tpu.pipeline_mode<synchronous>, transform_indices = @transform_2, window_bounds = array<i64: 8, 1>}, {transform_indices = @transform_3, window_bounds = array<i64: 8, 512>}]} {
    %c0 = arith.constant 0 : index
    %c0_0 = arith.constant 0 : index
    %0 = vector.load %arg2[%c0, %c0_0] : memref<8x128xf32, #tpu.memory_space<vmem>>, vector<8x128xf32>
    %c0_1 = arith.constant 0 : index
    %c0_2 = arith.constant 0 : index
    %1 = vector.load %arg1[%c0_1, %c0_2] : memref<128x512xf32, #tpu.memory_space<vmem>>, vector<128x512xf32>
    %cst = arith.constant dense<0.000000e+00> : vector<8x512xf32>
    %2 = tpu.matmul %0, %1, %cst {dimension_numbers = #tpu.dot_dimension_numbers<[1], [0], [0], [1], [0, 0, 1, 1], [], []>} : vector<8x128xf32>, vector<128x512xf32>, vector<8x512xf32> -> vector<8x512xf32>
    %c0_3 = arith.constant 0 : index
    %c0_4 = arith.constant 0 : index
    %3 = vector.load %arg3[%c0_3, %c0_4] : memref<8x1xf32, #tpu.memory_space<vmem>>, vector<8x1xf32>
    %4 = vector.broadcast %3 : vector<8x1xf32> to vector<8x512xf32>
    %5 = arith.addf %2, %4 : vector<8x512xf32>
    %6 = arith.negf %5 : vector<8x512xf32>
    %7 = math.exp %6 : vector<8x512xf32>
    %cst_5 = arith.constant 1.000000e+00 : f32
    %8 = vector.broadcast %cst_5 : f32 to vector<8x512xf32>
    %9 = arith.addf %8, %7 : vector<8x512xf32>
    %10 = arith.divf %8, %9 : vector<8x512xf32>
    %c0_6 = arith.constant 0 : index
    %c0_7 = arith.constant 0 : index
    %11 = vector.load %arg4[%c0_6, %c0_7] : memref<8x512xf32, #tpu.memory_space<vmem>>, vector<8x512xf32>
    tpu.vector_store %arg4[%c0_6, %c0_7], %10 {strides = array<i32>} : memref<8x512xf32, #tpu.memory_space<vmem>>, vector<8x512xf32>,
    return
  }
  func.func @transform_0(%arg0: i32) -> (i32, i32) {
    %c0_i32 = arith.constant 0 : i32
    %c0_i32_0 = arith.constant 0 : i32
    return %c0_i32, %arg0 : i32, i32
  }
  func.func @transform_1(%arg0: i32) -> (i32, i32) {
    %c0_i32 = arith.constant 0 : i32
    %c0_i32_0 = arith.constant 0 : i32
    %c0_i32_1 = arith.constant 0 : i32
    return %c0_i32, %c0_i32_0 : i32, i32
  }
  func.func @transform_2(%arg0: i32) -> (i32, i32) {
    %c0_i32 = arith.constant 0 : i32
    %c0_i32_0 = arith.constant 0 : i32
    %c0_i32_1 = arith.constant 0 : i32
    return %c0_i32, %c0_i32_0 : i32, i32
  }
  func.func @transform_3(%arg0: i32) -> (i32, i32) {
    %c0_i32 = arith.constant 0 : i32
    %c0_i32_0 = arith.constant 0 : i32
    return %c0_i32, %arg0 : i32, i32
  }
}

</mosaic_0001>

<llo_original>
// kernel: tpu_custom_call.1
$region0: #{tpu_custom_call.1}
  #allocation0 [shape = 'u32[]', space=smem, size = 0x4, offset = 0x4, fixed_abs, tag = 'smem constant byte address 0x4 - core index']
  #allocation1 [shape = 'u32[144,128]{1,0:T(1,128)}', space=vmem, size = 0x12000, scoped, tag = 'internal scratch']
  %s0 = inlined_call_operand.hbm [shape: f32[128,1024], index: 0, kind: input, shape index: {}]
  %s1 = inlined_call_operand.vmem [shape: f32[8,128], index: 1, kind: input, shape index: {}]
  %s2 = inlined_call_operand.vmem [shape: f32[8,1], index: 2, kind: input, shape index: {}]
  %s3 = inlined_call_operand.hbm [shape: f32[8,1024], index: 3, kind: output, shape index: {}]
  %s4 = sld [smem:[#allocation0]]
  $region49: #{tpu_custom_call.1} parent=0
    _
  %s6 = ssub.s32 1, %s4
  %s7 = scalar_select 0, %s6, %s4
  $region1: #{tpu_custom_call.1} parent=0
    #allocation2 [shape = 'u8[524288]{0}', space=vmem, size = 0x80000, scoped, tag = 'input window, operand 0']
    #allocation3 [shape = 's32[2]{0}', space=sflag, size = 0x8, scoped, tag = 'scoped memory for tpu_custom_call.1']
    #allocation4 [shape = 's32[2]{0}', space=sflag, size = 0x8, scoped, tag = 'scoped memory for tpu_custom_call.1']
    #allocation5 [shape = 'u8[32768]{0}', space=vmem, size = 0x8000, scoped, tag = 'output window, operand 0']
    %8 = vsyncpa [#allocation3], 0
    %s9 = scalar_lea.sflag [#allocation3], 1
    %10 = vsyncpa %s9, 0
    %11 = vsyncpa [#allocation4], 0
    %s12 = scalar_lea.sflag [#allocation4], 1
    %13 = vsyncpa %s12, 0
    loop: start=0, step=1, limit=4
    $region2: #{tpu_custom_call.1} parent=1 // loop_pre_header
      _
    $region3: #{tpu_custom_call.1} parent=1 // loop_header
      %s15 = sphi 0, %s19
      %p16 = scmp.ge.s32.totalorder %s15, 4
      %s25 = sphi 0, %s27
      %s28 = sphi 0, %s25
      %s29 = sphi 0, %s28
      %s45 = sphi 0, %s29
      %s49 = sphi 0, %s49
      %s51 = sphi 0, %s49
      %s52 = sphi 0, %s51
      %s66 = sphi 0, %s52
      %s70 = sphi 0, %s70
      %s72 = sphi 0, %s70
      %s73 = sphi 0, %s72
      %s87 = sphi 0, %s73
      %s93 = sphi 0, %s95
      %s96 = sphi 0, %s93
      %s97 = sphi 0, %s96
      %s113 = sphi 0, %s97
    $region4: #{tpu_custom_call.1} parent=1 // loop_header_branch
      %18 = sbr.rel (%p16) target = $region8
    $region5: #{tpu_custom_call.1} parent=1 // loop_body
      %s20 = ssub.s32 %s15, 1
      %s21 = ssub.s32 %s15, 2
      %s22 = sadd.s32 %s15, 1
      %s23 = ssub.s32 %s15, %s22
      %p24 = scmp.eq.s32.totalorder %s23, 0
      %s26 = sadd.s32 %s25, 1
      %s27 = scalar_select %p24, %s25, %s26
      %p30 = pneg %p24
      %p31 = scmp.eq.s32.totalorder %s15, 1
      %p32 = por %p30, %p31
      %p33 = scmp.ne.s32.totalorder %s25, %s28
      %p34 = scmp.eq.s32.totalorder %s15, 0
      %p35 = por %p33, %p34
      %p36 = scmp.ne.s32.totalorder %s25, %s28
      %p37 = scmp.eq.s32.totalorder %s20, 1
      %p38 = por %p36, %p37
      %p39 = scmp.ne.s32.totalorder %s28, %s29
      %p40 = scmp.eq.s32.totalorder %s20, 0
      %p41 = por %p39, %p40
      %p42 = scmp.ne.s32.totalorder %s28, %s29
      %p43 = scmp.eq.s32.totalorder %s21, 1
      %p44 = por %p42, %p43
      %p46 = scmp.ne.s32.totalorder %s29, %s45
      %p47 = scmp.eq.s32.totalorder %s21, 0
      %p48 = por %p46, %p47
      %s50 = sadd.s32 %s49, 1
      %p53 = scmp.eq.s32.totalorder %s15, 1
      %p54 = scmp.ne.s32.totalorder %s49, %s51
      %p55 = scmp.eq.s32.totalorder %s15, 0
      %p56 = por %p54, %p55
      %p57 = scmp.ne.s32.totalorder %s49, %s51
      %p58 = scmp.eq.s32.totalorder %s20, 1
      %p59 = por %p57, %p58
      %p60 = scmp.ne.s32.totalorder %s51, %s52
      %p61 = scmp.eq.s32.totalorder %s20, 0
      %p62 = por %p60, %p61
      %p63 = scmp.ne.s32.totalorder %s51, %s52
      %p64 = scmp.eq.s32.totalorder %s21, 1
      %p65 = por %p63, %p64
      %p67 = scmp.ne.s32.totalorder %s52, %s66
      %p68 = scmp.eq.s32.totalorder %s21, 0
      %p69 = por %p67, %p68
      %s71 = sadd.s32 %s70, 1
      %p74 = scmp.eq.s32.totalorder %s15, 1
      %p75 = scmp.ne.s32.totalorder %s70, %s72
      %p76 = scmp.eq.s32.totalorder %s15, 0
      %p77 = por %p75, %p76
      %p78 = scmp.ne.s32.totalorder %s70, %s72
      %p79 = scmp.eq.s32.totalorder %s20, 1
      %p80 = por %p78, %p79
      %p81 = scmp.ne.s32.totalorder %s72, %s73
      %p82 = scmp.eq.s32.totalorder %s20, 0
      %p83 = por %p81, %p82
      %p84 = scmp.ne.s32.totalorder %s72, %s73
      %p85 = scmp.eq.s32.totalorder %s21, 1
      %p86 = por %p84, %p85
      %p88 = scmp.ne.s32.totalorder %s73, %s87
      %p89 = scmp.eq.s32.totalorder %s21, 0
      %p90 = por %p88, %p89
      %s91 = ssub.s32 %s15, %s22
      %p92 = scmp.eq.s32.totalorder %s91, 0
      %s94 = sadd.s32 %s93, 1
      %s95 = scalar_select %p92, %s93, %s94
      %p98 = pneg %p92
      %p99 = scmp.eq.s32.totalorder %s15, 1
      %p100 = por %p98, %p99
      %p101 = scmp.ne.s32.totalorder %s93, %s96
      %p102 = scmp.eq.s32.totalorder %s15, 0
      %p103 = por %p101, %p102
      %p104 = scmp.ne.s32.totalorder %s93, %s96
      %p105 = scmp.eq.s32.totalorder %s20, 1
      %p106 = por %p104, %p105
      %p107 = scmp.ne.s32.totalorder %s96, %s97
      %p108 = scmp.eq.s32.totalorder %s20, 0
      %p109 = por %p107, %p108
      %p110 = scmp.ne.s32.totalorder %s96, %s97
      %p111 = scmp.eq.s32.totalorder %s21, 1
      %p112 = por %p110, %p111
      %p114 = scmp.ne.s32.totalorder %s97, %s113
      %p115 = scmp.eq.s32.totalorder %s21, 0
      %p116 = por %p114, %p115
      %p117 = scmp.le.s32.totalorder 1, %s15
      %p118 = scmp.lt.s32.totalorder %s15, 3
      %p119 = pnand %p117, %p118
      %p120 = pneg %p119
      // Predicated region
      $region9: #{tpu_custom_call.1} parent=5 // pred_check
        _
      $region10: #{tpu_custom_call.1} parent=5 // pred_check_branch
        %122 = sbr.rel (%p119) target = $region12
      $region11: #{tpu_custom_call.1} parent=5 // pred_region
        %s123 = ssub.s32 %s15, 1
        // Predicated region
        $region13: #{tpu_custom_call.1} parent=11 // pred_check
          %p124 = pneg %p62
        $region14: #{tpu_custom_call.1} parent=11 // pred_check_branch
          %126 = sbr.rel (%p124) target = $region16
        $region15: #{tpu_custom_call.1} parent=11 // pred_region
          _
        $region16: #{tpu_custom_call.1} parent=11 // pred_fallthru
          _
        // Predicated region
        $region17: #{tpu_custom_call.1} parent=11 // pred_check
          %p127 = pneg %p83
        $region18: #{tpu_custom_call.1} parent=11 // pred_check_branch
          %129 = sbr.rel (%p127) target = $region20
        $region19: #{tpu_custom_call.1} parent=11 // pred_region
          _
        $region20: #{tpu_custom_call.1} parent=11 // pred_fallthru
          _
      $region12: #{tpu_custom_call.1} parent=5 // pred_fallthru
        _
      %p130 = scmp.lt.s32.totalorder %s15, 2
      // Predicated region
      $region21: #{tpu_custom_call.1} parent=5 // pred_check
        %p131 = pneg %p130
      $region22: #{tpu_custom_call.1} parent=5 // pred_check_branch
        %133 = sbr.rel (%p131) target = $region24
      $region23: #{tpu_custom_call.1} parent=5 // pred_region
        // Predicated region
        $region25: #{tpu_custom_call.1} parent=23 // pred_check
          %p134 = pneg %p35
        $region26: #{tpu_custom_call.1} parent=23 // pred_check_branch
          %136 = sbr.rel (%p134) target = $region28
        $region27: #{tpu_custom_call.1} parent=23 // pred_region
          %s137 = sand.u32 %s25, 1
          %s138 = scalar_lea.sflag [#allocation3], %s137
          %s139 = sand.u32 %s25, 1
          %s140 = smul.addr %s139, 512
          %s141 = scalar_lea.vmem [#allocation2], %s140
          %s142 = smul.u32 4, %s15
          %s144 = ssub.s32 8192, 8192
          %145 = vsyncadd %s138, %s144
          %s146 = smul.addr %s142, 128
          %s147 = scalar_lea.hbm %s0, %s146
          %s148 = sshll.u32 %s141, 4
          %s149 = int_to_ptr.vmem [resolvable:$true] %s148
          %154 = dma.hbm_to_vmem [thread:$0]  %s147, 8192, %s149, %s138, 1024, 512, 32
        $region28: #{tpu_custom_call.1} parent=23 // pred_fallthru
          _
      $region24: #{tpu_custom_call.1} parent=5 // pred_fallthru
        _
      %p155 = scmp.le.s32.totalorder 1, %s15
      %p156 = scmp.lt.s32.totalorder %s15, 3
      %p157 = pnand %p155, %p156
      %p158 = pneg %p157
      // Predicated region
      $region29: #{tpu_custom_call.1} parent=5 // pred_check
        _
      $region30: #{tpu_custom_call.1} parent=5 // pred_check_branch
        %160 = sbr.rel (%p157) target = $region32
      $region31: #{tpu_custom_call.1} parent=5 // pred_region
        %s161 = ssub.s32 %s15, 1
        %s162 = sand.u32 %s28, 1
        %s163 = scalar_lea.sflag [#allocation3], %s162
        %s164 = sand.u32 %s28, 1
        %s165 = smul.addr %s164, 512
        %s166 = scalar_lea.vmem [#allocation2], %s165
        // Predicated region
        $region33: #{tpu_custom_call.1} parent=31 // pred_check
          %p167 = pneg %p41
        $region34: #{tpu_custom_call.1} parent=31 // pred_check_branch
          %169 = sbr.rel (%p167) target = $region36
        $region35: #{tpu_custom_call.1} parent=31 // pred_region
          %170 = dma.done %s163, 8192
        $region36: #{tpu_custom_call.1} parent=31 // pred_fallthru
          _
        %s171 = sand.u32 %s28, 1
        %s172 = scalar_lea.sflag [#allocation3], %s171
        %s173 = sand.u32 %s28, 1
        %s174 = smul.addr %s173, 512
        %s175 = scalar_lea.vmem [#allocation2], %s174
        %p176 = pneg %p41
        %p177 = pneg %p38
        %p178 = pneg %p62
        %p179 = pneg %p59
        %p180 = pneg %p83
        %p181 = pneg %p80
        %p182 = pneg %p109
        %p183 = pneg %p106
        %s184 = sand.u32 %s96, 1
        %s185 = scalar_lea.sflag [#allocation4], %s184
        %s186 = sand.u32 %s96, 1
        %s187 = smul.addr %s186, 32
        %s188 = scalar_lea.vmem [#allocation5], %s187
        %s189 = smul.u32 4, %s20
        %s190 = smul.u32 4, %s20
        %v191 = vld [vmem:[%s1] sm:$0xff]
        %v192 = vld [vmem:[%s166] sm:$0xff]
        %v193 = vld [vmem:[%s166 + $0x8] sm:$0xff]
        %v194 = vld [vmem:[%s166 + $0x10] sm:$0xff]
        %v195 = vld [vmem:[%s166 + $0x18] sm:$0xff]
        %v196 = vld [vmem:[%s166 + $0x20] sm:$0xff]
        %v197 = vld [vmem:[%s166 + $0x28] sm:$0xff]
        %v198 = vld [vmem:[%s166 + $0x30] sm:$0xff]
        %v199 = vld [vmem:[%s166 + $0x38] sm:$0xff]
        %v200 = vld [vmem:[%s166 + $0x40] sm:$0xff]
        %v201 = vld [vmem:[%s166 + $0x48] sm:$0xff]
        %v202 = vld [vmem:[%s166 + $0x50] sm:$0xff]
        %v203 = vld [vmem:[%s166 + $0x58] sm:$0xff]
        %v204 = vld [vmem:[%s166 + $0x60] sm:$0xff]
        %v205 = vld [vmem:[%s166 + $0x68] sm:$0xff]
        %v206 = vld [vmem:[%s166 + $0x70] sm:$0xff]
        %v207 = vld [vmem:[%s166 + $0x78] sm:$0xff]
        %v208 = vld [vmem:[%s166 + $0x80] sm:$0xff]
        %v209 = vld [vmem:[%s166 + $0x88] sm:$0xff]
        %v210 = vld [vmem:[%s166 + $0x90] sm:$0xff]
        %v211 = vld [vmem:[%s166 + $0x98] sm:$0xff]
        %v212 = vld [vmem:[%s166 + $0xa0] sm:$0xff]
        %v213 = vld [vmem:[%s166 + $0xa8] sm:$0xff]
        %v214 = vld [vmem:[%s166 + $0xb0] sm:$0xff]
        %v215 = vld [vmem:[%s166 + $0xb8] sm:$0xff]
        %v216 = vld [vmem:[%s166 + $0xc0] sm:$0xff]
        %v217 = vld [vmem:[%s166 + $0xc8] sm:$0xff]
        %v218 = vld [vmem:[%s166 + $0xd0] sm:$0xff]
        %v219 = vld [vmem:[%s166 + $0xd8] sm:$0xff]
        %v220 = vld [vmem:[%s166 + $0xe0] sm:$0xff]
        %v221 = vld [vmem:[%s166 + $0xe8] sm:$0xff]
        %v222 = vld [vmem:[%s166 + $0xf0] sm:$0xff]
        %v223 = vld [vmem:[%s166 + $0xf8] sm:$0xff]
        %v224 = vld [vmem:[%s166 + $0x100] sm:$0xff]
        %v225 = vld [vmem:[%s166 + $0x108] sm:$0xff]
        %v226 = vld [vmem:[%s166 + $0x110] sm:$0xff]
        %v227 = vld [vmem:[%s166 + $0x118] sm:$0xff]
        %v228 = vld [vmem:[%s166 + $0x120] sm:$0xff]
        %v229 = vld [vmem:[%s166 + $0x128] sm:$0xff]
        %v230 = vld [vmem:[%s166 + $0x130] sm:$0xff]
        %v231 = vld [vmem:[%s166 + $0x138] sm:$0xff]
        %v232 = vld [vmem:[%s166 + $0x140] sm:$0xff]
        %v233 = vld [vmem:[%s166 + $0x148] sm:$0xff]
        %v234 = vld [vmem:[%s166 + $0x150] sm:$0xff]
        %v235 = vld [vmem:[%s166 + $0x158] sm:$0xff]
        %v236 = vld [vmem:[%s166 + $0x160] sm:$0xff]
        %v237 = vld [vmem:[%s166 + $0x168] sm:$0xff]
        %v238 = vld [vmem:[%s166 + $0x170] sm:$0xff]
        %v239 = vld [vmem:[%s166 + $0x178] sm:$0xff]
        %v240 = vld [vmem:[%s166 + $0x180] sm:$0xff]
        %v241 = vld [vmem:[%s166 + $0x188] sm:$0xff]
        %v242 = vld [vmem:[%s166 + $0x190] sm:$0xff]
        %v243 = vld [vmem:[%s166 + $0x198] sm:$0xff]
        %v244 = vld [vmem:[%s166 + $0x1a0] sm:$0xff]
        %v245 = vld [vmem:[%s166 + $0x1a8] sm:$0xff]
        %v246 = vld [vmem:[%s166 + $0x1b0] sm:$0xff]
        %v247 = vld [vmem:[%s166 + $0x1b8] sm:$0xff]
        %v248 = vld [vmem:[%s166 + $0x1c0] sm:$0xff]
        %v249 = vld [vmem:[%s166 + $0x1c8] sm:$0xff]
        %v250 = vld [vmem:[%s166 + $0x1d0] sm:$0xff]
        %v251 = vld [vmem:[%s166 + $0x1d8] sm:$0xff]
        %v252 = vld [vmem:[%s166 + $0x1e0] sm:$0xff]
        %v253 = vld [vmem:[%s166 + $0x1e8] sm:$0xff]
        %v254 = vld [vmem:[%s166 + $0x1f0] sm:$0xff]
        %v255 = vld [vmem:[%s166 + $0x1f8] sm:$0xff]
        %v256 = vld [vmem:[%s2] sm:$0xff]
        %258 = vset.pattern.permute.xlu0 0
        %259 = vperm.xlu0 %258, %v256
        %v260 = vpop.permute.xlu0 %259
        %262 = vmatprep.subr.mxu0 %v253
        %263 = vmatpush1.msra.mxu0 %v252
        %264 = vmatprep.subr.mxu0 %v249
        %265 = vmatpush1.msra.mxu0 %v248
        %266 = vmatprep.subr.mxu0 %v245
        %267 = vmatpush1.msra.mxu0 %v244
        %268 = vmatprep.subr.mxu0 %v241
        %269 = vmatpush1.msra.mxu0 %v240
        %270 = vmatprep.subr.mxu0 %v237
        %271 = vmatpush1.msra.mxu0 %v236
        %272 = vmatprep.subr.mxu0 %v233
        %273 = vmatpush1.msra.mxu0 %v232
        %274 = vmatprep.subr.mxu0 %v229
        %275 = vmatpush1.msra.mxu0 %v228
        %276 = vmatprep.subr.mxu0 %v225
        %277 = vmatpush1.msra.mxu0 %v224
        %278 = vmatprep.subr.mxu0 %v221
        %279 = vmatpush1.msra.mxu0 %v220
        %280 = vmatprep.subr.mxu0 %v217
        %281 = vmatpush1.msra.mxu0 %v216
        %282 = vmatprep.subr.mxu0 %v213
        %283 = vmatpush1.msra.mxu0 %v212
        %284 = vmatprep.subr.mxu0 %v209
        %285 = vmatpush1.msra.mxu0 %v208
        %286 = vmatprep.subr.mxu0 %v205
        %287 = vmatpush1.msra.mxu0 %v204
        %288 = vmatprep.subr.mxu0 %v201
        %289 = vmatpush1.msra.mxu0 %v200
        %290 = vmatprep.subr.mxu0 %v197
        %291 = vmatpush1.msra.mxu0 %v196
        %292 = vmatprep.subr.mxu0 %v193
        %293 = vmatpush1.msra.mxu0 %v192
        %294 = vmatprep.subr.mxu0 0.0
        %295 = vmatpush2.msra.mxu0 0.0
        %296 = vmatprep.subr.mxu0 0.0
        %297 = vmatpush2.msra.mxu0 0.0
        %298 = vmatprep.subr.mxu0 0.0
        %299 = vmatpush2.msra.mxu0 0.0
        %300 = vmatprep.subr.mxu0 0.0
        %301 = vmatpush2.msra.mxu0 0.0
        %302 = vmatprep.subr.mxu0 0.0
        %303 = vmatpush2.msra.mxu0 0.0
        %304 = vmatprep.subr.mxu0 0.0
        %305 = vmatpush2.msra.mxu0 0.0
        %306 = vmatprep.subr.mxu0 0.0
        %307 = vmatpush2.msra.mxu0 0.0
        %308 = vmatprep.subr.mxu0 0.0
        %309 = vmatpush2.msra.mxu0 0.0
        %310 = vmatprep.subr.mxu0 0.0
        %311 = vmatpush2.msra.mxu0 0.0
        %312 = vmatprep.subr.mxu0 0.0
        %313 = vmatpush2.msra.mxu0 0.0
        %314 = vmatprep.subr.mxu0 0.0
        %315 = vmatpush2.msra.mxu0 0.0
        %316 = vmatprep.subr.mxu0 0.0
        %317 = vmatpush2.msra.mxu0 0.0
        %318 = vmatprep.subr.mxu0 0.0
        %319 = vmatpush2.msra.mxu0 0.0
        %320 = vmatprep.subr.mxu0 0.0
        %321 = vmatpush2.msra.mxu0 0.0
        %322 = vmatprep.subr.mxu0 0.0
        %323 = vmatpush2.msra.mxu0 0.0
        %324 = vmatprep.subr.mxu0 0.0
        %325 = vmatpush2.msra.mxu0 0.0
        %326 = vmatprep.mubr.f32.mxu0 0.0
        %327 = vmatmul.mubr.f32.gmra.mxu0 %v191
        %v328 = vpop.f32.mrf.mxu0
        %v329 = vadd.f32 %v260, %v328
        %v330 = vpop.f32.mrf.mxu0
        %v331 = vadd.f32 %v260, %v330
        %332 = vdwg.mxu0
        %333 = vmatprep.subr.mxu0 %v255
        %334 = vmatpush1.msra.mxu0 %v254
        %335 = vmatprep.subr.mxu0 %v251
        %336 = vmatpush1.msra.mxu0 %v250
        %337 = vmatprep.subr.mxu0 %v247
        %338 = vmatpush1.msra.mxu0 %v246
        %339 = vmatprep.subr.mxu0 %v243
        %340 = vmatpush1.msra.mxu0 %v242
        %341 = vmatprep.subr.mxu0 %v239
        %342 = vmatpush1.msra.mxu0 %v238
        %343 = vmatprep.subr.mxu0 %v235
        %344 = vmatpush1.msra.mxu0 %v234
        %345 = vmatprep.subr.mxu0 %v231
        %346 = vmatpush1.msra.mxu0 %v230
        %347 = vmatprep.subr.mxu0 %v227
        %348 = vmatpush1.msra.mxu0 %v226
        %349 = vmatprep.subr.mxu0 %v223
        %350 = vmatpush1.msra.mxu0 %v222
        %351 = vmatprep.subr.mxu0 %v219
        %352 = vmatpush1.msra.mxu0 %v218
        %353 = vmatprep.subr.mxu0 %v215
        %354 = vmatpush1.msra.mxu0 %v214
        %355 = vmatprep.subr.mxu0 %v211
        %356 = vmatpush1.msra.mxu0 %v210
        %357 = vmatprep.subr.mxu0 %v207
        %358 = vmatpush1.msra.mxu0 %v206
        %359 = vmatprep.subr.mxu0 %v203
        %360 = vmatpush1.msra.mxu0 %v202
        %361 = vmatprep.subr.mxu0 %v199
        %362 = vmatpush1.msra.mxu0 %v198
        %363 = vmatprep.subr.mxu0 %v195
        %364 = vmatpush1.msra.mxu0 %v194
        %365 = vmatprep.subr.mxu0 0.0
        %366 = vmatpush2.msra.mxu0 0.0
        %367 = vmatprep.subr.mxu0 0.0
        %368 = vmatpush2.msra.mxu0 0.0
        %369 = vmatprep.subr.mxu0 0.0
        %370 = vmatpush2.msra.mxu0 0.0
        %371 = vmatprep.subr.mxu0 0.0
        %372 = vmatpush2.msra.mxu0 0.0
        %373 = vmatprep.subr.mxu0 0.0
        %374 = vmatpush2.msra.mxu0 0.0
        %375 = vmatprep.subr.mxu0 0.0
        %376 = vmatpush2.msra.mxu0 0.0
        %377 = vmatprep.subr.mxu0 0.0
        %378 = vmatpush2.msra.mxu0 0.0
        %379 = vmatprep.subr.mxu0 0.0
        %380 = vmatpush2.msra.mxu0 0.0
        %381 = vmatprep.subr.mxu0 0.0
        %382 = vmatpush2.msra.mxu0 0.0
        %383 = vmatprep.subr.mxu0 0.0
        %384 = vmatpush2.msra.mxu0 0.0
        %385 = vmatprep.subr.mxu0 0.0
        %386 = vmatpush2.msra.mxu0 0.0
        %387 = vmatprep.subr.mxu0 0.0
        %388 = vmatpush2.msra.mxu0 0.0
        %389 = vmatprep.subr.mxu0 0.0
        %390 = vmatpush2.msra.mxu0 0.0
        %391 = vmatprep.subr.mxu0 0.0
        %392 = vmatpush2.msra.mxu0 0.0
        %393 = vmatprep.subr.mxu0 0.0
        %394 = vmatpush2.msra.mxu0 0.0
        %395 = vmatprep.subr.mxu0 0.0
        %396 = vmatpush2.msra.mxu0 0.0
        %397 = vmatprep.mubr.f32.mxu0 0.0
        %398 = vmatmul.mubr.f32.gmra.mxu0 %v191
        %v399 = vpop.f32.mrf.mxu0
        %v400 = vadd.f32 %v260, %v399
        %v401 = vpop.f32.mrf.mxu0
        %v402 = vadd.f32 %v260, %v401
        %403 = vdwg.mxu0
        %v404 = vxor.u32 %v329, 2147483648
        %v405 = vxor.u32 %v331, 2147483648
        %v406 = vxor.u32 %v400, 2147483648
        %v407 = vxor.u32 %v402, 2147483648
        %v408 = vmul.f32 %v404, 1.442695
        %v409 = vpow.pop %v408
        %v410 = vmul.f32 %v405, 1.442695
        %v411 = vpow.pop %v410
        %v412 = vmul.f32 %v406, 1.442695
        %v413 = vpow.pop %v412
        %v414 = vmul.f32 %v407, 1.442695
        %v415 = vpow.pop %v414
        %v416 = vadd.f32 %v409, 1.0
        %v417 = vadd.f32 %v411, 1.0
        %v418 = vadd.f32 %v413, 1.0
        %v419 = vadd.f32 %v415, 1.0
        %v420 = vrcp.pop %v416
        %v421 = vmul.f32 1.0, %v420
        %v422 = vrcp.pop %v417
        %v423 = vmul.f32 1.0, %v422
        %v424 = vrcp.pop %v418
        %v425 = vmul.f32 1.0, %v424
        %v426 = vrcp.pop %v419
        %v427 = vmul.f32 1.0, %v426
        %428 = vst [vmem:[%s188] sm:$0xff] %v421
        %429 = vst [vmem:[%s188 + $0x8] sm:$0xff] %v423
        %430 = vst [vmem:[%s188 + $0x10] sm:$0xff] %v425
        %431 = vst [vmem:[%s188 + $0x18] sm:$0xff] %v427
        %s432 = sand.u32 %s96, 1
        %s433 = scalar_lea.sflag [#allocation4], %s432
        %s434 = sand.u32 %s96, 1
        %s435 = smul.addr %s434, 32
        %s436 = scalar_lea.vmem [#allocation5], %s435
        // Predicated region
        $region37: #{tpu_custom_call.1} parent=31 // pred_check
          %p437 = pneg %p106
        $region38: #{tpu_custom_call.1} parent=31 // pred_check_branch
          %439 = sbr.rel (%p437) target = $region40
        $region39: #{tpu_custom_call.1} parent=31 // pred_region
          %s440 = smul.u32 4, %s20
          %s442 = ssub.s32 512, 512
          %443 = vsyncadd %s433, %s442
          %s444 = smul.addr %s440, 128
          %s445 = scalar_lea.hbm %s3, %s444
          %s447 = sshll.u32 %s436, 4
          %s448 = int_to_ptr.vmem [resolvable:$true] %s447
          %450 = dma.vmem_to_hbm [thread:$0]  %s448, 512, %s445, %s433
        $region40: #{tpu_custom_call.1} parent=31 // pred_fallthru
          _
      $region32: #{tpu_custom_call.1} parent=5 // pred_fallthru
        _
      %p451 = scmp.le.s32.totalorder 2, %s15
      // Predicated region
      $region41: #{tpu_custom_call.1} parent=5 // pred_check
        %p452 = pneg %p451
      $region42: #{tpu_custom_call.1} parent=5 // pred_check_branch
        %454 = sbr.rel (%p452) target = $region44
      $region43: #{tpu_custom_call.1} parent=5 // pred_region
        %s455 = ssub.s32 %s15, 2
        // Predicated region
        $region45: #{tpu_custom_call.1} parent=43 // pred_check
          %p456 = pneg %p112
        $region46: #{tpu_custom_call.1} parent=43 // pred_check_branch
          %458 = sbr.rel (%p456) target = $region48
        $region47: #{tpu_custom_call.1} parent=43 // pred_region
          %s459 = sand.u32 %s97, 1
          %s460 = scalar_lea.sflag [#allocation4], %s459
          %s461 = sand.u32 %s97, 1
          %s462 = smul.addr %s461, 32
          %s463 = scalar_lea.vmem [#allocation5], %s462
          %464 = dma.done %s460, 512
        $region48: #{tpu_custom_call.1} parent=43 // pred_fallthru
          _
      $region44: #{tpu_custom_call.1} parent=5 // pred_fallthru
        _
    $region6: #{tpu_custom_call.1} parent=1 // loop_footer
      %s19 = sadd.s32 1, %s15
    $region7: #{tpu_custom_call.1} parent=1 // loop_footer_branch
      %14 = sbr.rel target = $region3
    $region8: #{tpu_custom_call.1} parent=1 // loop_exit
      _
    %465 = vsyncpa [#allocation3], 1
    %s466 = scalar_lea.sflag [#allocation3], 1
    %467 = vsyncpa %s466, 1
    %468 = vsyncpa [#allocation4], 1
    %s469 = scalar_lea.sflag [#allocation4], 1
    %470 = vsyncpa %s469, 1

</llo_original>
